<compile_context>
chip_gen: v6e
topology: v6e:2x2x1
jax: 0.10.0
libtpu: 0.0.40
codegen_flags: <defaults>
</compile_context>

<pallas_src>
import math

import jax
import jax.numpy as jnp
from jax import lax
from jax.experimental import pallas as pl
from jax.experimental.pallas import tpu as pltpu

_EPS = 1e-6


# --------------------------------------------------------------------------
# Prologue: adaLN modulation for the whole batch (one shot, tiny).
#   shift = SiLU(c) @ W[:, :H] + b[:H],  scale = SiLU(c) @ W[:, H:] + b[H:]
# --------------------------------------------------------------------------
def adaln_kernel(c_ref, ws_ref, bs_ref, wc_ref, bc_ref, shift_ref, scale_ref):
    c = c_ref[...].astype(jnp.float32)                       # (N, H)
    silu_c = c * jax.nn.sigmoid(c)
    silu_cd = silu_c.astype(ws_ref.dtype)                    # MXU operand dtype
    shift_ref[...] = (jnp.dot(silu_cd, ws_ref[...],
                              preferred_element_type=jnp.float32)
                      + bs_ref[...]).astype(shift_ref.dtype)
    scale_ref[...] = (jnp.dot(silu_cd, wc_ref[...],
                              preferred_element_type=jnp.float32)
                      + bc_ref[...]).astype(scale_ref.dtype)


# --------------------------------------------------------------------------
# Main kernel: LayerNorm (no affine) + modulate + final Linear, per token tile.
# --------------------------------------------------------------------------
def final_layer_kernel(shift_ref, scale_ref, x_ref, wl_ref, bl_ref, o_ref):
    x = x_ref[0].astype(jnp.float32)                         # (tile_t, H)
    mean = jnp.mean(x, axis=-1, keepdims=True)
    xc = x - mean
    var = jnp.mean(xc * xc, axis=-1, keepdims=True)

    scale = scale_ref[0].astype(jnp.float32)                 # (1, H)
    shift = shift_ref[0].astype(jnp.float32)                 # (1, H)

    # Fused LN * (1+scale): one multiplier, one FMA-style pass.
    mult = lax.rsqrt(var + _EPS) * (1.0 + scale)             # (tile_t, H)
    x_mod = xc * mult + shift

    y = (jnp.dot(x_mod.astype(wl_ref.dtype), wl_ref[...],
                 preferred_element_type=jnp.float32) + bl_ref[...])
    o_ref[0] = y.astype(o_ref.dtype)                         # (tile_t, out_pad)


def _pick_tile_t(T, cap=512):
    """Largest divisor of T that is <= cap, preferring multiples of 8."""
    if T <= cap:
        return T
    fallback = 1
    for d in range(cap, 0, -1):
        if T % d == 0:
            if d % 8 == 0:
                return d
            if fallback == 1:
                fallback = d
    return fallback


def final_layer(x, c, params, *, tile_t=None, compute_dtype=jnp.float32,
                vmem_limit_bytes=48 * 1024 * 1024):
    """FinalLayer forward.

    x: (N, T, H) tokens (any float dtype; streamed as-is),
    c: (N, H) conditioning vector.
    params = (w_ada, b_ada, w_lin, b_lin), weights stored (in, out):
      w_ada: (H, 2H)   [columns 0:H -> shift, H:2H -> scale]
      b_ada: (2H,)
      w_lin: (H, patch_size**2 * out_channels)
      b_lin: (out_dim,)
    Returns (N, T, out_dim) in x.dtype.
    """
    w_ada, b_ada, w_lin, b_lin = params
    N, T, H = x.shape
    out_dim = w_lin.shape[1]
    out_dtype = x.dtype

    if tile_t is None:
        tile_t = _pick_tile_t(T)
    assert T % tile_t == 0, "T must be a multiple of tile_t"
    n_tiles = T // tile_t

    # ---- adaLN params, split wrapper-side (torch .chunk(2, dim=1)) ----------
    w_shift = w_ada[:, :H].astype(compute_dtype)
    w_scale = w_ada[:, H:].astype(compute_dtype)
    b_shift = b_ada[:H].reshape(1, H).astype(jnp.float32)
    b_scale = b_ada[H:].reshape(1, H).astype(jnp.float32)

    # ---- Prologue: shift/scale for the whole batch (single pallas_call) -----
    shift, scale = pl.pallas_call(
        adaln_kernel,
        out_shape=(jax.ShapeDtypeStruct((N, H), jnp.float32),
                   jax.ShapeDtypeStruct((N, H), jnp.float32)),
    )(c, w_shift, b_shift, w_scale, b_scale)
    shift3 = shift.reshape(N, 1, H)
    scale3 = scale.reshape(N, 1, H)

    # ---- Final-linear params, zero-padded to a lane-dense column count ------
    out_pad = ((out_dim + 127) // 128) * 128
    w_lin_p = jnp.zeros((H, out_pad), compute_dtype).at[:, :out_dim].set(
        w_lin.astype(compute_dtype))
    b_lin_p = jnp.zeros((1, out_pad), jnp.float32).at[:, :out_dim].set(
        b_lin.astype(jnp.float32))

    grid = (N, n_tiles)

    in_specs = [
        pl.BlockSpec((1, 1, H), lambda n, i: (n, 0, 0)),        # shift
        pl.BlockSpec((1, 1, H), lambda n, i: (n, 0, 0)),        # scale
        pl.BlockSpec((1, tile_t, H), lambda n, i: (n, i, 0)),   # x (native dtype)
        pl.BlockSpec((H, out_pad), lambda n, i: (0, 0)),        # w_lin (padded)
        pl.BlockSpec((1, out_pad), lambda n, i: (0, 0)),        # b_lin (padded)
    ]
    out_specs = pl.BlockSpec((1, tile_t, out_pad), lambda n, i: (n, i, 0))

    # Advisory cost hint (post-restructuring traffic).
    flops = 2 * N * T * H * out_pad + 8 * N * T * H
    transcendentals = N * T                                     # rsqrt per row
    bytes_accessed = (
        N * T * H * x.dtype.itemsize                            # x reads
        + 2 * N * H * 4                                         # shift/scale
        + H * out_pad * jnp.dtype(compute_dtype).itemsize       # w_lin
        + out_pad * 4                                           # b_lin
        + N * T * out_pad * jnp.dtype(out_dtype).itemsize)      # output writes

    out_p = pl.pallas_call(
        final_layer_kernel,
        out_shape=jax.ShapeDtypeStruct((N, T, out_pad), out_dtype),
        grid=grid,
        in_specs=in_specs,
        out_specs=out_specs,
        compiler_params=pltpu.CompilerParams(
            dimension_semantics=("parallel", "parallel"),
            vmem_limit_bytes=vmem_limit_bytes),
        cost_estimate=pl.CostEstimate(
            flops=flops, transcendentals=transcendentals,
            bytes_accessed=bytes_accessed),
    )(shift3, scale3, x, w_lin_p, b_lin_p)

    return out_p[..., :out_dim]


# --------------------------------------------------------------------------
# Pure-JAX reference mirroring the PyTorch FinalLayer forward (f32 math).
# --------------------------------------------------------------------------
def final_layer_ref(x, c, params):
    w_ada, b_ada, w_lin, b_lin = params
    H = x.shape[-1]
    c32 = c.astype(jnp.float32)
    silu_c = c32 * jax.nn.sigmoid(c32)
    ada = jnp.dot(silu_c, w_ada.astype(jnp.float32),
                  preferred_element_type=jnp.float32) + b_ada
    shift, scale = ada[:, :H], ada[:, H:]            # torch .chunk(2, dim=1)
    x32 = x.astype(jnp.float32)
    mean = jnp.mean(x32, axis=-1, keepdims=True)
    xc = x32 - mean
    var = jnp.mean(xc * xc, axis=-1, keepdims=True)
    x_norm = xc * lax.rsqrt(var + _EPS)
    x_mod = x_norm * (1.0 + scale[:, None, :]) + shift[:, None, :]
    y = jnp.dot(x_mod, w_lin.astype(jnp.float32),
                preferred_element_type=jnp.float32) + b_lin
    return y


def init_params(key, hidden_size, patch_size, out_channels):
    """Deterministic synthetic init (weights stored (in, out))."""
    out_dim = patch_size * patch_size * out_channels
    k1, k2, k3, k4 = jax.random.split(key, 4)
    s = 1.0 / math.sqrt(hidden_size)
    w_ada = jax.random.uniform(k1, (hidden_size, 2 * hidden_size),
                               jnp.float32, -s, s)
    b_ada = jax.random.uniform(k2, (2 * hidden_size,), jnp.float32, -s, s)
    w_lin = jax.random.uniform(k3, (hidden_size, out_dim), jnp.float32, -s, s)
    b_lin = jax.random.uniform(k4, (out_dim,), jnp.float32, -s, s)
    return w_ada, b_ada, w_lin, b_lin


if __name__ == "__main__":
    hidden_size = 32
    patch_size = 2
    out_channels = 4
    N, T = 2, 16

    key = jax.random.PRNGKey(0)
    pkey, xkey, ckey = jax.random.split(key, 3)
    params = init_params(pkey, hidden_size, patch_size, out_channels)
    x = jax.random.normal(xkey, (N, T, hidden_size), jnp.float32)
    c = jax.random.normal(ckey, (N, hidden_size), jnp.float32)

    out_dim = patch_size * patch_size * out_channels

    # f32 activations + weights: matches the PyTorch-equivalent reference.
    out = jax.block_until_ready(final_layer(x, c, params))
    ref = final_layer_ref(x, c, params)
    assert out.shape == (N, T, out_dim)
    assert jnp.allclose(out, ref, atol=1e-3, rtol=1e-3), \
        float(jnp.max(jnp.abs(out - ref)))

    # bf16 activations + weights (the real-DiT regime): activations streamed
    # as bf16, all accumulation / LN math stays in f32 inside the kernels.
    x_bf = x.astype(jnp.bfloat16)
    c_bf = c.astype(jnp.bfloat16)
    out_bf = jax.block_until_ready(
        final_layer(x_bf, c_bf, params, compute_dtype=jnp.bfloat16))
    ref_bf = final_layer_ref(x_bf, c_bf, params)
    assert out_bf.shape == (N, T, out_dim)
    assert jnp.allclose(out_bf.astype(jnp.float32), ref_bf,
                        atol=3e-2, rtol=3e-2), \
        float(jnp.max(jnp.abs(out_bf.astype(jnp.float32) - ref_bf)))

    print("KERNEL_OK")
</pallas_src>

<mosaic_0001>
module attributes {stable_mosaic.version = 11 : i64} {
  func.func @adaln_kernel(%arg0: memref<2x32xf32, #tpu.memory_space<vmem>>, %arg1: memref<32x32xf32, #tpu.memory_space<vmem>>, %arg2: memref<1x32xf32, #tpu.memory_space<vmem>>, %arg3: memref<32x32xf32, #tpu.memory_space<vmem>>, %arg4: memref<1x32xf32, #tpu.memory_space<vmem>>, %arg5: memref<2x32xf32, #tpu.memory_space<vmem>>, %arg6: memref<2x32xf32, #tpu.memory_space<vmem>>) attributes {dimension_semantics = [], scalar_prefetch = 0 : i64, scratch_operands = 0 : i64, tpu.core_type = #tpu.core_type<tc>} {
    %c0 = arith.constant 0 : index
    %c0_0 = arith.constant 0 : index
    %0 = vector.load %arg0[%c0, %c0_0] : memref<2x32xf32, #tpu.memory_space<vmem>>, vector<2x32xf32>
    %1 = arith.negf %0 : vector<2x32xf32>
    %2 = math.exp %1 : vector<2x32xf32>
    %cst = arith.constant 1.000000e+00 : f32
    %3 = vector.broadcast %cst : f32 to vector<2x32xf32>
    %4 = arith.addf %3, %2 : vector<2x32xf32>
    %5 = arith.divf %3, %4 : vector<2x32xf32>
    %6 = arith.mulf %0, %5 : vector<2x32xf32>
    %c0_1 = arith.constant 0 : index
    %c0_2 = arith.constant 0 : index
    %7 = vector.load %arg1[%c0_1, %c0_2] : memref<32x32xf32, #tpu.memory_space<vmem>>, vector<32x32xf32>
    %cst_3 = arith.constant dense<0.000000e+00> : vector<2x32xf32>
    %8 = tpu.matmul %6, %7, %cst_3 {dimension_numbers = #tpu.dot_dimension_numbers<[1], [0], [0], [1], [0, 0, 1, 1], [], []>} : vector<2x32xf32>, vector<32x32xf32>, vector<2x32xf32> -> vector<2x32xf32>
    %c0_4 = arith.constant 0 : index
    %c0_5 = arith.constant 0 : index
    %9 = vector.load %arg2[%c0_4, %c0_5] : memref<1x32xf32, #tpu.memory_space<vmem>>, vector<1x32xf32>
    %10 = vector.broadcast %9 : vector<1x32xf32> to vector<2x32xf32>
    %11 = arith.addf %8, %10 : vector<2x32xf32>
    %c0_6 = arith.constant 0 : index
    %c0_7 = arith.constant 0 : index
    %12 = vector.load %arg5[%c0_6, %c0_7] : memref<2x32xf32, #tpu.memory_space<vmem>>, vector<2x32xf32>
    tpu.vector_store %arg5[%c0_6, %c0_7], %11 {strides = array<i32>} : memref<2x32xf32, #tpu.memory_space<vmem>>, vector<2x32xf32>,
    %c0_8 = arith.constant 0 : index
    %c0_9 = arith.constant 0 : index
    %13 = vector.load %arg3[%c0_8, %c0_9] : memref<32x32xf32, #tpu.memory_space<vmem>>, vector<32x32xf32>
    %cst_10 = arith.constant dense<0.000000e+00> : vector<2x32xf32>
    %14 = tpu.matmul %6, %13, %cst_10 {dimension_numbers = #tpu.dot_dimension_numbers<[1], [0], [0], [1], [0, 0, 1, 1], [], []>} : vector<2x32xf32>, vector<32x32xf32>, vector<2x32xf32> -> vector<2x32xf32>
    %c0_11 = arith.constant 0 : index
    %c0_12 = arith.constant 0 : index
    %15 = vector.load %arg4[%c0_11, %c0_12] : memref<1x32xf32, #tpu.memory_space<vmem>>, vector<1x32xf32>
    %16 = vector.broadcast %15 : vector<1x32xf32> to vector<2x32xf32>
    %17 = arith.addf %14, %16 : vector<2x32xf32>
    %c0_13 = arith.constant 0 : index
    %c0_14 = arith.constant 0 : index
    %18 = vector.load %arg6[%c0_13, %c0_14] : memref<2x32xf32, #tpu.memory_space<vmem>>, vector<2x32xf32>
    tpu.vector_store %arg6[%c0_13, %c0_14], %17 {strides = array<i32>} : memref<2x32xf32, #tpu.memory_space<vmem>>, vector<2x32xf32>,
    return
  }
}

</mosaic_0001>

<llo_original>
// kernel: tpu_custom_call.1
$region0: #{tpu_custom_call.1}
  #allocation0 [shape = 'u32[]', space=smem, size = 0x4, offset = 0x4, fixed_abs, tag = 'smem constant byte address 0x4 - core index']
  #allocation1 [shape = 'u32[144,128]{1,0:T(1,128)}', space=vmem, size = 0x12000, scoped, tag = 'internal scratch']
  %s0 = inlined_call_operand.hbm [shape: f32[2,32], index: 0, kind: input, shape index: {}]
  %s1 = inlined_call_operand.hbm [shape: f32[32,32], index: 1, kind: input, shape index: {}]
  %s2 = inlined_call_operand.vmem [shape: f32[1,32], index: 2, kind: input, shape index: {}]
  %s3 = inlined_call_operand.hbm [shape: f32[32,32], index: 3, kind: input, shape index: {}]
  %s4 = inlined_call_operand.vmem [shape: f32[1,32], index: 4, kind: input, shape index: {}]
  %s5 = inlined_call_operand.hbm [shape: f32[2,32], index: 5, kind: output, shape index: {0}]
  %s6 = inlined_call_operand.hbm [shape: f32[2,32], index: 6, kind: output, shape index: {1}]
  %7 = xla_tuple %s5, %s6
  %s8 = sld [smem:[#allocation0]]
  $region50: #{tpu_custom_call.1} parent=0
    _
  %s10 = ssub.s32 1, %s8
  %s11 = scalar_select 0, %s10, %s8
  $region1: #{tpu_custom_call.1} parent=0
    #allocation2 [shape = 'u8[1024]{0}', space=vmem, size = 0x400, scoped, tag = 'input window, operand 0, single buffered']
    #allocation3 [shape = 's32[1]{0}', space=sflag, size = 0x4, scoped, tag = 'scoped memory for tpu_custom_call.1']
    #allocation4 [shape = 's32[1]{0}', space=sflag, size = 0x4, scoped, tag = 'scoped memory for tpu_custom_call.1']
    #allocation5 [shape = 'u8[16384]{0}', space=vmem, size = 0x4000, scoped, tag = 'input window, operand 1, single buffered']
    #allocation6 [shape = 's32[1]{0}', space=sflag, size = 0x4, scoped, tag = 'scoped memory for tpu_custom_call.1']
    #allocation7 [shape = 'u8[16384]{0}', space=vmem, size = 0x4000, scoped, tag = 'input window, operand 3, single buffered']
    #allocation8 [shape = 'u8[1024]{0}', space=vmem, size = 0x400, scoped, tag = 'output window, operand 0, single buffered']
    #allocation9 [shape = 'u8[1024]{0}', space=vmem, size = 0x400, scoped, tag = 'output window, operand 1, single buffered']
    #allocation10 [shape = 's32[1]{0}', space=sflag, size = 0x4, scoped, tag = 'scoped memory for tpu_custom_call.1']
    %12 = vsyncpa [#allocation3], 0
    %13 = vsyncpa [#allocation6], 0
    %14 = vsyncpa [#allocation4], 0
    %15 = vsyncpa [#allocation10], 0
    // Predicated region
    $region2: #{tpu_custom_call.1} parent=1 // pred_check
      _
    $region3: #{tpu_custom_call.1} parent=1 // pred_check_branch
      %17 = sbr.rel (0) target = $region5
    $region4: #{tpu_custom_call.1} parent=1 // pred_region
      %s19 = ssub.s32 32, 32
      %20 = vsyncadd [#allocation3], %s19
      %s22 = sshll.u32 [#allocation2], 4
      %s23 = int_to_ptr.vmem [resolvable:$true] %s22
      %25 = dma.hbm_to_vmem [thread:$0]  %s0, 32, %s23, [#allocation3]
    $region5: #{tpu_custom_call.1} parent=1 // pred_fallthru
      _
    // Predicated region
    $region6: #{tpu_custom_call.1} parent=1 // pred_check
      _
    $region7: #{tpu_custom_call.1} parent=1 // pred_check_branch
      %27 = sbr.rel (0) target = $region9
    $region8: #{tpu_custom_call.1} parent=1 // pred_region
      %s29 = ssub.s32 512, 512
      %30 = vsyncadd [#allocation6], %s29
      %s31 = sshll.u32 [#allocation5], 4
      %s32 = int_to_ptr.vmem [resolvable:$true] %s31
      %37 = dma.hbm_to_vmem [thread:$0]  %s1, 512, %s32, [#allocation6], 128, 128, 8
    $region9: #{tpu_custom_call.1} parent=1 // pred_fallthru
      _
    // Predicated region
    $region10: #{tpu_custom_call.1} parent=1 // pred_check
      _
    $region11: #{tpu_custom_call.1} parent=1 // pred_check_branch
      %39 = sbr.rel (0) target = $region13
    $region12: #{tpu_custom_call.1} parent=1 // pred_region
      _
    $region13: #{tpu_custom_call.1} parent=1 // pred_fallthru
      _
    // Predicated region
    $region14: #{tpu_custom_call.1} parent=1 // pred_check
      _
    $region15: #{tpu_custom_call.1} parent=1 // pred_check_branch
      %41 = sbr.rel (0) target = $region17
    $region16: #{tpu_custom_call.1} parent=1 // pred_region
      %s43 = ssub.s32 512, 512
      %44 = vsyncadd [#allocation6], %s43
      %s45 = sshll.u32 [#allocation7], 4
      %s46 = int_to_ptr.vmem [resolvable:$true] %s45
      %51 = dma.hbm_to_vmem [thread:$0]  %s3, 512, %s46, [#allocation6], 128, 128, 8
    $region17: #{tpu_custom_call.1} parent=1 // pred_fallthru
      _
    // Predicated region
    $region18: #{tpu_custom_call.1} parent=1 // pred_check
      _
    $region19: #{tpu_custom_call.1} parent=1 // pred_check_branch
      %53 = sbr.rel (0) target = $region21
    $region20: #{tpu_custom_call.1} parent=1 // pred_region
      _
    $region21: #{tpu_custom_call.1} parent=1 // pred_fallthru
      _
    // Predicated region
    $region22: #{tpu_custom_call.1} parent=1 // pred_check
      _
    $region23: #{tpu_custom_call.1} parent=1 // pred_check_branch
      %55 = sbr.rel (0) target = $region25
    $region24: #{tpu_custom_call.1} parent=1 // pred_region
      %56 = dma.done [#allocation3], 32
    $region25: #{tpu_custom_call.1} parent=1 // pred_fallthru
      _
    // Predicated region
    $region26: #{tpu_custom_call.1} parent=1 // pred_check
      _
    $region27: #{tpu_custom_call.1} parent=1 // pred_check_branch
      %58 = sbr.rel (0) target = $region29
    $region28: #{tpu_custom_call.1} parent=1 // pred_region
      %59 = dma.done [#allocation6], 512
    $region29: #{tpu_custom_call.1} parent=1 // pred_fallthru
      _
    // Predicated region
    $region30: #{tpu_custom_call.1} parent=1 // pred_check
      _
    $region31: #{tpu_custom_call.1} parent=1 // pred_check_branch
      %61 = sbr.rel (0) target = $region33
    $region32: #{tpu_custom_call.1} parent=1 // pred_region
      %62 = dma.done [#allocation6], 512
    $region33: #{tpu_custom_call.1} parent=1 // pred_fallthru
      _
    %v63 = vld [vmem:[#allocation2] sm:$0x3]
    %v64 = vxor.u32 %v63, 2147483648
    %v65 = vmul.f32 %v64, 1.442695
    %v66 = vpow.pop %v65
    %v67 = vadd.f32 %v66, 1.0
    %v68 = vrcp.pop %v67
    %v69 = vmul.f32 1.0, %v68
    %v70 = vmul.f32 %v63, %v69
    %v71 = vld [vmem:[#allocation5] sm:$0xff]
    %v72 = vld [vmem:[#allocation5 + $0x8] sm:$0xff]
    %v73 = vld [vmem:[#allocation5 + $0x10] sm:$0xff]
    %v74 = vld [vmem:[#allocation5 + $0x18] sm:$0xff]
    %v75 = vld [vmem:[%s2] sm:$0x1]
    %v77 = vlaneseq
    %v78 = vshrl.u32 %v77, 7
    %v79 = vsub.s32 0, %v78
    %v80 = vrot.slane %v75, %v79
    %vm82 = vcmask 261120
    %v84 = vsel %vm82, %v70, 0
    %86 = vmatprep.subr.mxu0 0.0
    %87 = vmatpush1.msra.mxu0 0.0
    %88 = vmatprep.subr.mxu0 0.0
    %89 = vmatpush1.msra.mxu0 0.0
    %90 = vmatprep.subr.mxu0 0.0
    %91 = vmatpush1.msra.mxu0 0.0
    %92 = vmatprep.subr.mxu0 0.0
    %93 = vmatpush1.msra.mxu0 0.0
    %94 = vmatprep.subr.mxu0 0.0
    %95 = vmatpush1.msra.mxu0 0.0
    %96 = vmatprep.subr.mxu0 0.0
    %97 = vmatpush1.msra.mxu0 0.0
    %98 = vmatprep.subr.mxu0 0.0
    %99 = vmatpush1.msra.mxu0 0.0
    %100 = vmatprep.subr.mxu0 0.0
    %101 = vmatpush1.msra.mxu0 0.0
    %102 = vmatprep.subr.mxu0 0.0
    %103 = vmatpush1.msra.mxu0 0.0
    %104 = vmatprep.subr.mxu0 0.0
    %105 = vmatpush1.msra.mxu0 0.0
    %106 = vmatprep.subr.mxu0 0.0
    %107 = vmatpush1.msra.mxu0 0.0
    %108 = vmatprep.subr.mxu0 0.0
    %109 = vmatpush1.msra.mxu0 0.0
    %110 = vmatprep.subr.mxu0 0.0
    %111 = vmatpush1.msra.mxu0 %v74
    %112 = vmatprep.subr.mxu0 0.0
    %113 = vmatpush1.msra.mxu0 %v73
    %114 = vmatprep.subr.mxu0 0.0
    %115 = vmatpush1.msra.mxu0 %v72
    %116 = vmatprep.subr.mxu0 0.0
    %117 = vmatpush1.msra.mxu0 %v71
    %118 = vmatprep.subr.mxu0 0.0
    %119 = vmatpush2.msra.mxu0 0.0
    %120 = vmatprep.subr.mxu0 0.0
    %121 = vmatpush2.msra.mxu0 0.0
    %122 = vmatprep.subr.mxu0 0.0
    %123 = vmatpush2.msra.mxu0 0.0
    %124 = vmatprep.subr.mxu0 0.0
    %125 = vmatpush2.msra.mxu0 0.0
    %126 = vmatprep.subr.mxu0 0.0
    %127 = vmatpush2.msra.mxu0 0.0
    %128 = vmatprep.subr.mxu0 0.0
    %129 = vmatpush2.msra.mxu0 0.0
    %130 = vmatprep.subr.mxu0 0.0
    %131 = vmatpush2.msra.mxu0 0.0
    %132 = vmatprep.subr.mxu0 0.0
    %133 = vmatpush2.msra.mxu0 0.0
    %134 = vmatprep.subr.mxu0 0.0
    %135 = vmatpush2.msra.mxu0 0.0
    %136 = vmatprep.subr.mxu0 0.0
    %137 = vmatpush2.msra.mxu0 0.0
    %138 = vmatprep.subr.mxu0 0.0
    %139 = vmatpush2.msra.mxu0 0.0
    %140 = vmatprep.subr.mxu0 0.0
    %141 = vmatpush2.msra.mxu0 0.0
    %142 = vmatprep.subr.mxu0 0.0
    %143 = vmatpush2.msra.mxu0 0.0
    %144 = vmatprep.subr.mxu0 0.0
    %145 = vmatpush2.msra.mxu0 0.0
    %146 = vmatprep.subr.mxu0 0.0
    %147 = vmatpush2.msra.mxu0 0.0
    %148 = vmatprep.subr.mxu0 0.0
    %149 = vmatpush2.msra.mxu0 0.0
    %150 = vmatprep.mubr.f32.mxu0 0.0
    %151 = vmatmul.mubr.f32.gmra.mxu0 %v84
    %v152 = vpop.f32.mrf.mxu0
    %v153 = vadd.f32 %v80, %v152
    %v154 = vpop.f32.mrf.mxu0
    %155 = vdwg.mxu0
    %vm156 = vcmask 254976
    %157 = vst.msk [vmem:[#allocation8] sm:$0x3] %vm156, %v153
    %v158 = vld [vmem:[#allocation7] sm:$0xff]
    %v159 = vld [vmem:[#allocation7 + $0x8] sm:$0xff]
    %v160 = vld [vmem:[#allocation7 + $0x10] sm:$0xff]
    %v161 = vld [vmem:[#allocation7 + $0x18] sm:$0xff]
    %v162 = vld [vmem:[%s4] sm:$0x1]
    %v164 = vlaneseq
    %v165 = vshrl.u32 %v164, 7
    %v166 = vsub.s32 0, %v165
    %v167 = vrot.slane %v162, %v166
    %169 = vmatprep.subr.mxu0 0.0
    %170 = vmatpush1.msra.mxu0 0.0
    %171 = vmatprep.subr.mxu0 0.0
    %172 = vmatpush1.msra.mxu0 0.0
    %173 = vmatprep.subr.mxu0 0.0
    %174 = vmatpush1.msra.mxu0 0.0
    %175 = vmatprep.subr.mxu0 0.0
    %176 = vmatpush1.msra.mxu0 0.0
    %177 = vmatprep.subr.mxu0 0.0
    %178 = vmatpush1.msra.mxu0 0.0
    %179 = vmatprep.subr.mxu0 0.0
    %180 = vmatpush1.msra.mxu0 0.0
    %181 = vmatprep.subr.mxu0 0.0
    %182 = vmatpush1.msra.mxu0 0.0
    %183 = vmatprep.subr.mxu0 0.0
    %184 = vmatpush1.msra.mxu0 0.0
    %185 = vmatprep.subr.mxu0 0.0
    %186 = vmatpush1.msra.mxu0 0.0
    %187 = vmatprep.subr.mxu0 0.0
    %188 = vmatpush1.msra.mxu0 0.0
    %189 = vmatprep.subr.mxu0 0.0
    %190 = vmatpush1.msra.mxu0 0.0
    %191 = vmatprep.subr.mxu0 0.0
    %192 = vmatpush1.msra.mxu0 0.0
    %193 = vmatprep.subr.mxu0 0.0
    %194 = vmatpush1.msra.mxu0 %v161
    %195 = vmatprep.subr.mxu0 0.0
    %196 = vmatpush1.msra.mxu0 %v160
    %197 = vmatprep.subr.mxu0 0.0
    %198 = vmatpush1.msra.mxu0 %v159
    %199 = vmatprep.subr.mxu0 0.0
    %200 = vmatpush1.msra.mxu0 %v158
    %201 = vmatprep.subr.mxu0 0.0
    %202 = vmatpush2.msra.mxu0 0.0
    %203 = vmatprep.subr.mxu0 0.0
    %204 = vmatpush2.msra.mxu0 0.0
    %205 = vmatprep.subr.mxu0 0.0
    %206 = vmatpush2.msra.mxu0 0.0
    %207 = vmatprep.subr.mxu0 0.0
    %208 = vmatpush2.msra.mxu0 0.0
    %209 = vmatprep.subr.mxu0 0.0
    %210 = vmatpush2.msra.mxu0 0.0
    %211 = vmatprep.subr.mxu0 0.0
    %212 = vmatpush2.msra.mxu0 0.0
    %213 = vmatprep.subr.mxu0 0.0
    %214 = vmatpush2.msra.mxu0 0.0
    %215 = vmatprep.subr.mxu0 0.0
    %216 = vmatpush2.msra.mxu0 0.0
    %217 = vmatprep.subr.mxu0 0.0
    %218 = vmatpush2.msra.mxu0 0.0
    %219 = vmatprep.subr.mxu0 0.0
    %220 = vmatpush2.msra.mxu0 0.0
    %221 = vmatprep.subr.mxu0 0.0
    %222 = vmatpush2.msra.mxu0 0.0
    %223 = vmatprep.subr.mxu0 0.0
    %224 = vmatpush2.msra.mxu0 0.0
    %225 = vmatprep.subr.mxu0 0.0
    %226 = vmatpush2.msra.mxu0 0.0
    %227 = vmatprep.subr.mxu0 0.0
    %228 = vmatpush2.msra.mxu0 0.0
    %229 = vmatprep.subr.mxu0 0.0
    %230 = vmatpush2.msra.mxu0 0.0
    %231 = vmatprep.subr.mxu0 0.0
    %232 = vmatpush2.msra.mxu0 0.0
    %233 = vmatprep.mubr.f32.mxu0 0.0
    %234 = vmatmul.mubr.f32.gmra.mxu0 %v84
    %v235 = vpop.f32.mrf.mxu0
    %v236 = vadd.f32 %v167, %v235
    %v237 = vpop.f32.mrf.mxu0
    %238 = vdwg.mxu0
    %239 = vst.msk [vmem:[#allocation9] sm:$0x3] %vm156, %v236
    // Predicated region
    $region34: #{tpu_custom_call.1} parent=1 // pred_check
      _
    $region35: #{tpu_custom_call.1} parent=1 // pred_check_branch
      %241 = sbr.rel (0) target = $region37
    $region36: #{tpu_custom_call.1} parent=1 // pred_region
      %s243 = ssub.s32 32, 32
      %244 = vsyncadd [#allocation4], %s243
      %s246 = sshll.u32 [#allocation8], 4
      %s247 = int_to_ptr.vmem [resolvable:$true] %s246
      %249 = dma.vmem_to_hbm [thread:$0]  %s247, 32, %s5, [#allocation4]
    $region37: #{tpu_custom_call.1} parent=1 // pred_fallthru
      _
    // Predicated region
    $region38: #{tpu_custom_call.1} parent=1 // pred_check
      _
    $region39: #{tpu_custom_call.1} parent=1 // pred_check_branch
      %251 = sbr.rel (0) target = $region41
    $region40: #{tpu_custom_call.1} parent=1 // pred_region
      %s253 = ssub.s32 32, 32
      %254 = vsyncadd [#allocation10], %s253
      %s256 = sshll.u32 [#allocation9], 4
      %s257 = int_to_ptr.vmem [resolvable:$true] %s256
      %259 = dma.vmem_to_hbm [thread:$0]  %s257, 32, %s6, [#allocation10]
    $region41: #{tpu_custom_call.1} parent=1 // pred_fallthru
      _
    // Predicated region
    $region42: #{tpu_custom_call.1} parent=1 // pred_check
      _
    $region43: #{tpu_custom_call.1} parent=1 // pred_check_branch
      %261 = sbr.rel (0) target = $region45
    $region44: #{tpu_custom_call.1} parent=1 // pred_region
      %262 = dma.done [#allocation4], 32
    $region45: #{tpu_custom_call.1} parent=1 // pred_fallthru
      _
    // Predicated region
    $region46: #{tpu_custom_call.1} parent=1 // pred_check
      _
    $region47: #{tpu_custom_call.1} parent=1 // pred_check_branch
      %264 = sbr.rel (0) target = $region49
    $region48: #{tpu_custom_call.1} parent=1 // pred_region
      %265 = dma.done [#allocation10], 32
    $region49: #{tpu_custom_call.1} parent=1 // pred_fallthru
      _
    %266 = vsyncpa [#allocation3], 1
    %267 = vsyncpa [#allocation6], 1
    %268 = vsyncpa [#allocation4], 1
    %269 = vsyncpa [#allocation10], 1

</llo_original>
